<compile_context>
chip_gen: v7x
topology: tpu7x:2x2x1
jax: 0.10.0
libtpu: 0.0.40
codegen_flags: <defaults>
</compile_context>

<pallas_src>
import functools

import jax
import jax.numpy as jnp
from jax.experimental import pallas as pl
from jax.experimental.pallas import tpu as pltpu


def _round_up(n, m):
    return ((n + m - 1) // m) * m


def _sigmoid_tanh(z):
    # sigmoid(z) = 0.5 * tanh(0.5 * z) + 0.5 : one EUP push + 2 cheap VALU ops.
    return 0.5 * jnp.tanh(0.5 * z) + 0.5


def _default_bf16_activations():
    """bf16 VPU/EUP exists on v6e / v7x; stay f32 elsewhere (v5e, v4, ...)."""
    try:
        kind = jax.devices()[0].device_kind.lower()
    except Exception:
        return False
    return ("v6" in kind) or ("v7" in kind)


def _mlp_kernel(x_ref, w1_ref, b1_ref, w2_ref, b2_ref, w3_ref, b3_ref, o_ref,
                *, act_dtype):
    # x tile: (8, TILE_B) f32, lane-dense.  bf16 in-register for the MXU.
    x = x_ref[...].astype(jnp.bfloat16)

    # layer 1: (60, 8) @ (8, TILE_B) -> (60, TILE_B), f32 accumulation.
    z1 = jnp.dot(w1_ref[...], x, preferred_element_type=jnp.float32) + b1_ref[...]
    h1 = _sigmoid_tanh(z1.astype(act_dtype))

    # layer 2: (10, 60) @ (60, TILE_B) -> (10, TILE_B).
    z2 = (jnp.dot(w2_ref[...], h1.astype(jnp.bfloat16),
                  preferred_element_type=jnp.float32) + b2_ref[...])
    h2 = _sigmoid_tanh(z2.astype(act_dtype))

    # layer 3 (10 -> 1) on the VPU/XLU: lane-broadcast the (10, 1) weight
    # column, multiply, sublane-reduce.  Result is a lane-dense (1, TILE_B)
    # row, so the final store is unmasked.  b3 is a scalar read from SMEM.
    z3 = jnp.sum(w3_ref[...] * h2.astype(jnp.float32), axis=0, keepdims=True)
    z3 = z3 + b3_ref[0, 0]
    o_ref[...] = _sigmoid_tanh(z3).astype(o_ref.dtype)


def diabetes_classifier_forward(x, params, *, tile_b=8192, bf16_activations=None):
    """x: (B, 8) float32.  params: PyTorch-shaped weights/biases.  Returns (B, 1) f32."""
    B, F = x.shape
    assert F == 8, f"expected 8 input features, got {F}"

    if bf16_activations is None:
        bf16_activations = _default_bf16_activations()
    act_dtype = jnp.bfloat16 if bf16_activations else jnp.float32

    # Batch tile: multiple of 128 (lane-dense blocks), no bigger than needed,
    # capped at 16384 (~8 MiB VMEM incl. intermediates -> safe on v5e/v6e/v7x
    # scoped defaults with no vmem_limit override).
    tile_b = max(128, min(_round_up(tile_b, 128), _round_up(B, 128), 16384))
    # Keep >= 2 grid steps when the batch allows it, so the "parallel" axis
    # can be sharded across both v7x TensorCores.
    if _round_up(B, 128) >= 256 and _round_up(B, tile_b) == tile_b:
        tile_b = max(128, _round_up(tile_b // 2, 128))
    b_pad = _round_up(B, tile_b)
    num_blocks = b_pad // tile_b

    # Feature-major, lane-dense x: (8, b_pad).  One wrapper-side pad+transpose;
    # the kernel then never needs a relayout anywhere.
    x_pad = jnp.pad(x, ((0, b_pad - B), (0, 0))) if b_pad != B else x
    x_t = x_pad.astype(jnp.float32).T                         # (8, b_pad)

    # PyTorch-native (out, in) weights go straight in; biases become columns.
    w1 = params["w1"].astype(jnp.bfloat16)                    # (60, 8)
    w2 = params["w2"].astype(jnp.bfloat16)                    # (10, 60)
    w3 = params["w3"].astype(jnp.float32).reshape(1, 10).T    # (10, 1), VPU use
    b1 = params["b1"].astype(jnp.float32).reshape(60, 1)
    b2 = params["b2"].astype(jnp.float32).reshape(10, 1)
    b3 = params["b3"].astype(jnp.float32).reshape(1, 1)       # SMEM scalar

    args = (x_t, w1, b1, w2, b2, w3, b3)
    bytes_accessed = sum(int(a.size) * a.dtype.itemsize for a in args) + b_pad * 4
    flops = b_pad * (2 * (8 * 60 + 60 * 10 + 10 * 1) + 3 * (60 + 10 + 1))
    transcendentals = b_pad * (60 + 10 + 1)

    out = pl.pallas_call(
        functools.partial(_mlp_kernel, act_dtype=act_dtype),
        out_shape=jax.ShapeDtypeStruct((1, b_pad), jnp.float32),
        grid=(num_blocks,),
        in_specs=[
            pl.BlockSpec((8, tile_b), lambda i: (0, i)),        # x: lane-dense tile
            pl.BlockSpec((60, 8), lambda i: (0, 0)),            # w1: resident
            pl.BlockSpec((60, 1), lambda i: (0, 0)),            # b1: resident
            pl.BlockSpec((10, 60), lambda i: (0, 0)),           # w2: resident
            pl.BlockSpec((10, 1), lambda i: (0, 0)),            # b2: resident
            pl.BlockSpec((10, 1), lambda i: (0, 0)),            # w3: resident
            pl.BlockSpec(memory_space=pltpu.MemorySpace.SMEM),  # b3 scalar
        ],
        out_specs=pl.BlockSpec((1, tile_b), lambda i: (0, i)),  # lane-dense row
        compiler_params=pltpu.CompilerParams(
            dimension_semantics=("parallel",)),
        cost_estimate=pl.CostEstimate(
            flops=int(flops),
            transcendentals=int(transcendentals),
            bytes_accessed=int(bytes_accessed)),
    )(*args)

    # (1, b_pad) -> (b_pad, 1) is a free row-major reshape; drop padded rows.
    return out.reshape(b_pad, 1)[:B]


def init_params(key):
    """Deterministic synthetic parameters in PyTorch nn.Linear shapes:
    weight: (out_features, in_features), bias: (out_features,)."""
    ks = jax.random.split(key, 6)

    def uniform(k, shape, fan_in):
        bound = 1.0 / jnp.sqrt(jnp.float32(fan_in))
        return jax.random.uniform(k, shape, jnp.float32, -bound, bound)

    return {
        "w1": uniform(ks[0], (60, 8), 8.0),
        "b1": uniform(ks[1], (60,), 8.0),
        "w2": uniform(ks[2], (10, 60), 60.0),
        "b2": uniform(ks[3], (10,), 60.0),
        "w3": uniform(ks[4], (1, 10), 10.0),
        "b3": uniform(ks[5], (1,), 10.0),
    }


def _reference_forward_f32(x, params):
    """Pure f32 reference matching the PyTorch module."""
    h1 = jax.nn.sigmoid(x @ params["w1"].T + params["b1"])
    h2 = jax.nn.sigmoid(h1 @ params["w2"].T + params["b2"])
    return jax.nn.sigmoid(h2 @ params["w3"].T + params["b3"])


def _reference_forward_matched(x, params, act_dtype):
    """Same arithmetic recipe as the kernel (bf16 MXU operands, f32
    accumulation, tanh-form sigmoid in act_dtype, f32 output layer)."""
    w1 = params["w1"].astype(jnp.bfloat16)
    w2 = params["w2"].astype(jnp.bfloat16)
    z1 = (jnp.dot(x.astype(jnp.bfloat16), w1.T, preferred_element_type=jnp.float32)
          + params["b1"].astype(jnp.float32))
    h1 = _sigmoid_tanh(z1.astype(act_dtype))
    z2 = (jnp.dot(h1.astype(jnp.bfloat16), w2.T, preferred_element_type=jnp.float32)
          + params["b2"].astype(jnp.float32))
    h2 = _sigmoid_tanh(z2.astype(act_dtype))
    z3 = (h2.astype(jnp.float32) @ params["w3"].astype(jnp.float32).T
          + params["b3"].astype(jnp.float32))
    return _sigmoid_tanh(z3)


if __name__ == "__main__":
    key = jax.random.PRNGKey(0)
    k_x, k_x2, k_p = jax.random.split(key, 3)
    params = init_params(k_p)
    act_dtype = jnp.bfloat16 if _default_bf16_activations() else jnp.float32

    # Small batch: pads to a single 128-row tile, grid=(1,).
    x = jax.random.normal(k_x, (8, 8), dtype=jnp.float32)
    out = jax.block_until_ready(diabetes_classifier_forward(x, params))
    assert out.shape == (8, 1), out.shape
    ref_match = _reference_forward_matched(x, params, act_dtype)
    ref_f32 = _reference_forward_f32(x, params)
    assert jnp.allclose(out, ref_match, atol=1e-2, rtol=1e-2), \
        "mismatch vs dtype-matched reference"
    assert jnp.allclose(out, ref_f32, atol=5e-2, rtol=5e-2), \
        "mismatch vs f32 reference"

    # Batch not divisible by the tile -> zero padding + multi-step grid
    # (the wrapper auto-splits so the 'parallel' axis has >= 2 steps).
    x2 = jax.random.normal(k_x2, (300, 8), dtype=jnp.float32)
    out2 = jax.block_until_ready(diabetes_classifier_forward(x2, params))
    assert out2.shape == (300, 1), out2.shape
    ref2 = _reference_forward_matched(x2, params, act_dtype)
    assert jnp.allclose(out2, ref2, atol=1e-2, rtol=1e-2), \
        "mismatch on multi-tile batch"

    print("KERNEL_OK")
</pallas_src>

<mosaic_0001>
module attributes {stable_mosaic.version = 11 : i64} {
  func.func @_mlp_kernel(%arg0: i32, %arg1: memref<8x128xf32, #tpu.memory_space<vmem>>, %arg2: memref<60x8xbf16, #tpu.memory_space<vmem>>, %arg3: memref<60x1xf32, #tpu.memory_space<vmem>>, %arg4: memref<10x60xbf16, #tpu.memory_space<vmem>>, %arg5: memref<10x1xf32, #tpu.memory_space<vmem>>, %arg6: memref<10x1xf32, #tpu.memory_space<vmem>>, %arg7: memref<1x1xf32, #tpu.memory_space<smem>>, %arg8: memref<1x128xf32, #tpu.memory_space<vmem>>) attributes {dimension_semantics = [#tpu.dimension_semantics<parallel>], iteration_bounds = array<i64: 1>, scalar_prefetch = 0 : i64, scratch_operands = 0 : i64, tpu.core_type = #tpu.core_type<tc>, window_params = [{transform_indices = @transform_0, window_bounds = array<i64: 8, 128>}, {pipeline_mode = #tpu.pipeline_mode<synchronous>, transform_indices = @transform_1, window_bounds = array<i64: 60, 8>}, {pipeline_mode = #tpu.pipeline_mode<synchronous>, transform_indices = @transform_2, window_bounds = array<i64: 60, 1>}, {pipeline_mode = #tpu.pipeline_mode<synchronous>, transform_indices = @transform_3, window_bounds = array<i64: 10, 60>}, {pipeline_mode = #tpu.pipeline_mode<synchronous>, transform_indices = @transform_4, window_bounds = array<i64: 10, 1>}, {pipeline_mode = #tpu.pipeline_mode<synchronous>, transform_indices = @transform_5, window_bounds = array<i64: 10, 1>}, {transform_indices = @transform_6, window_bounds = array<i64: 1, 1>}, {transform_indices = @transform_7, window_bounds = array<i64: 1, 128>}]} {
    %c0 = arith.constant 0 : index
    %c0_0 = arith.constant 0 : index
    %0 = vector.load %arg1[%c0, %c0_0] : memref<8x128xf32, #tpu.memory_space<vmem>>, vector<8x128xf32>
    %1 = arith.truncf %0 : vector<8x128xf32> to vector<8x128xbf16>
    %c0_1 = arith.constant 0 : index
    %c0_2 = arith.constant 0 : index
    %2 = vector.load %arg2[%c0_1, %c0_2] : memref<60x8xbf16, #tpu.memory_space<vmem>>, vector<60x8xbf16>
    %cst = arith.constant dense<0.000000e+00> : vector<60x128xf32>
    %3 = tpu.matmul %2, %1, %cst {dimension_numbers = #tpu.dot_dimension_numbers<[1], [0], [0], [1], [0, 0, 1, 1], [], []>} : vector<60x8xbf16>, vector<8x128xbf16>, vector<60x128xf32> -> vector<60x128xf32>
    %c0_3 = arith.constant 0 : index
    %c0_4 = arith.constant 0 : index
    %4 = vector.load %arg3[%c0_3, %c0_4] : memref<60x1xf32, #tpu.memory_space<vmem>>, vector<60x1xf32>
    %5 = vector.broadcast %4 : vector<60x1xf32> to vector<60x128xf32>
    %6 = arith.addf %3, %5 : vector<60x128xf32>
    %cst_5 = arith.constant 5.000000e-01 : f32
    %7 = vector.broadcast %cst_5 : f32 to vector<60x128xf32>
    %8 = arith.mulf %7, %6 : vector<60x128xf32>
    %9 = math.tanh %8 : vector<60x128xf32>
    %cst_6 = arith.constant 5.000000e-01 : f32
    %10 = vector.broadcast %cst_6 : f32 to vector<60x128xf32>
    %11 = arith.mulf %10, %9 : vector<60x128xf32>
    %cst_7 = arith.constant 5.000000e-01 : f32
    %12 = vector.broadcast %cst_7 : f32 to vector<60x128xf32>
    %13 = arith.addf %11, %12 : vector<60x128xf32>
    %c0_8 = arith.constant 0 : index
    %c0_9 = arith.constant 0 : index
    %14 = vector.load %arg4[%c0_8, %c0_9] : memref<10x60xbf16, #tpu.memory_space<vmem>>, vector<10x60xbf16>
    %15 = arith.truncf %13 : vector<60x128xf32> to vector<60x128xbf16>
    %cst_10 = arith.constant dense<0.000000e+00> : vector<10x128xf32>
    %16 = tpu.matmul %14, %15, %cst_10 {dimension_numbers = #tpu.dot_dimension_numbers<[1], [0], [0], [1], [0, 0, 1, 1], [], []>} : vector<10x60xbf16>, vector<60x128xbf16>, vector<10x128xf32> -> vector<10x128xf32>
    %c0_11 = arith.constant 0 : index
    %c0_12 = arith.constant 0 : index
    %17 = vector.load %arg5[%c0_11, %c0_12] : memref<10x1xf32, #tpu.memory_space<vmem>>, vector<10x1xf32>
    %18 = vector.broadcast %17 : vector<10x1xf32> to vector<10x128xf32>
    %19 = arith.addf %16, %18 : vector<10x128xf32>
    %cst_13 = arith.constant 5.000000e-01 : f32
    %20 = vector.broadcast %cst_13 : f32 to vector<10x128xf32>
    %21 = arith.mulf %20, %19 : vector<10x128xf32>
    %22 = math.tanh %21 : vector<10x128xf32>
    %cst_14 = arith.constant 5.000000e-01 : f32
    %23 = vector.broadcast %cst_14 : f32 to vector<10x128xf32>
    %24 = arith.mulf %23, %22 : vector<10x128xf32>
    %cst_15 = arith.constant 5.000000e-01 : f32
    %25 = vector.broadcast %cst_15 : f32 to vector<10x128xf32>
    %26 = arith.addf %24, %25 : vector<10x128xf32>
    %c0_16 = arith.constant 0 : index
    %c0_17 = arith.constant 0 : index
    %27 = vector.load %arg6[%c0_16, %c0_17] : memref<10x1xf32, #tpu.memory_space<vmem>>, vector<10x1xf32>
    %28 = vector.broadcast %27 : vector<10x1xf32> to vector<10x128xf32>
    %29 = arith.mulf %28, %26 : vector<10x128xf32>
    %cst_18 = arith.constant dense<0.000000e+00> : vector<128xf32>
    %30 = vector.multi_reduction <add>, %29, %cst_18 [0] : vector<10x128xf32> to vector<128xf32>
    %31 = vector.shape_cast %30 : vector<128xf32> to vector<1x128xf32>
    %c0_19 = arith.constant 0 : index
    %c0_20 = arith.constant 0 : index
    %32 = memref.load %arg7[%c0_19, %c0_20] : memref<1x1xf32, #tpu.memory_space<smem>>
    %33 = vector.broadcast %32 : f32 to vector<1x128xf32>
    %34 = arith.addf %31, %33 : vector<1x128xf32>
    %cst_21 = arith.constant 5.000000e-01 : f32
    %35 = vector.broadcast %cst_21 : f32 to vector<1x128xf32>
    %36 = arith.mulf %35, %34 : vector<1x128xf32>
    %37 = math.tanh %36 : vector<1x128xf32>
    %cst_22 = arith.constant 5.000000e-01 : f32
    %38 = vector.broadcast %cst_22 : f32 to vector<1x128xf32>
    %39 = arith.mulf %38, %37 : vector<1x128xf32>
    %cst_23 = arith.constant 5.000000e-01 : f32
    %40 = vector.broadcast %cst_23 : f32 to vector<1x128xf32>
    %41 = arith.addf %39, %40 : vector<1x128xf32>
    %c0_24 = arith.constant 0 : index
    %c0_25 = arith.constant 0 : index
    %42 = vector.load %arg8[%c0_24, %c0_25] : memref<1x128xf32, #tpu.memory_space<vmem>>, vector<1x128xf32>
    tpu.vector_store %arg8[%c0_24, %c0_25], %41 {strides = array<i32>} : memref<1x128xf32, #tpu.memory_space<vmem>>, vector<1x128xf32>,
    return
  }
  func.func @transform_0(%arg0: i32) -> (i32, i32) {
    %c0_i32 = arith.constant 0 : i32
    %c0_i32_0 = arith.constant 0 : i32
    return %c0_i32, %arg0 : i32, i32
  }
  func.func @transform_1(%arg0: i32) -> (i32, i32) {
    %c0_i32 = arith.constant 0 : i32
    %c0_i32_0 = arith.constant 0 : i32
    %c0_i32_1 = arith.constant 0 : i32
    return %c0_i32, %c0_i32_0 : i32, i32
  }
  func.func @transform_2(%arg0: i32) -> (i32, i32) {
    %c0_i32 = arith.constant 0 : i32
    %c0_i32_0 = arith.constant 0 : i32
    %c0_i32_1 = arith.constant 0 : i32
    return %c0_i32, %c0_i32_0 : i32, i32
  }
  func.func @transform_3(%arg0: i32) -> (i32, i32) {
    %c0_i32 = arith.constant 0 : i32
    %c0_i32_0 = arith.constant 0 : i32
    %c0_i32_1 = arith.constant 0 : i32
    return %c0_i32, %c0_i32_0 : i32, i32
  }
  func.func @transform_4(%arg0: i32) -> (i32, i32) {
    %c0_i32 = arith.constant 0 : i32
    %c0_i32_0 = arith.constant 0 : i32
    %c0_i32_1 = arith.constant 0 : i32
    return %c0_i32, %c0_i32_0 : i32, i32
  }
  func.func @transform_5(%arg0: i32) -> (i32, i32) {
    %c0_i32 = arith.constant 0 : i32
    %c0_i32_0 = arith.constant 0 : i32
    %c0_i32_1 = arith.constant 0 : i32
    return %c0_i32, %c0_i32_0 : i32, i32
  }
  func.func @transform_6(%arg0: i32) -> (i32, i32) {
    %c0_i32 = arith.constant 0 : i32
    %c0_i32_0 = arith.constant 0 : i32
    %c0_i32_1 = arith.constant 0 : i32
    return %c0_i32, %c0_i32_0 : i32, i32
  }
  func.func @transform_7(%arg0: i32) -> (i32, i32) {
    %c0_i32 = arith.constant 0 : i32
    %c0_i32_0 = arith.constant 0 : i32
    return %c0_i32, %arg0 : i32, i32
  }
}

</mosaic_0001>

<llo_original>
// kernel: tpu_custom_call.1
$region0: #{tpu_custom_call.1}
  #allocation0 [shape = 'u32[]', space=smem, size = 0x4, offset = 0x4, fixed_abs, tag = 'smem constant byte address 0x4 - core index']
  #allocation1 [shape = 'u32[144,128]{1,0:T(1,128)}', space=vmem, size = 0x12000, scoped, tag = 'internal scratch']
  #allocation2 [shape = 'f32[1,1]{1,0:T(1,128)S(6)}', space=smem, size = 0x200, scoped, tag = 'scoped memory for tpu_custom_call.1']
  %s0 = inlined_call_operand.vmem [shape: f32[8,128], index: 0, kind: input, shape index: {}]
  %s1 = inlined_call_operand.vmem [shape: bf16[60,8], index: 1, kind: input, shape index: {}]
  %s2 = inlined_call_operand.vmem [shape: f32[60,1], index: 2, kind: input, shape index: {}]
  %s3 = inlined_call_operand.vmem [shape: bf16[10,60], index: 3, kind: input, shape index: {}]
  %s4 = inlined_call_operand.vmem [shape: f32[10,1], index: 4, kind: input, shape index: {}]
  %s5 = inlined_call_operand.vmem [shape: f32[10,1], index: 5, kind: input, shape index: {}]
  %s6 = inlined_call_operand.<no memory space> [shape: f32[1,1], index: 6, kind: input, shape index: {}]
  %s7 = inlined_call_operand.hbm [shape: f32[1,128], index: 7, kind: output, shape index: {}]
  %s8 = sld [smem:[#allocation0]]
  $region38: #{tpu_custom_call.1} parent=0
    _
  %s10 = ssub.s32 1, %s8
  %s11 = scalar_select 0, %s10, %s8
  %12 = sst [smem:[#allocation2]] %s6
  $region1: #{tpu_custom_call.1} parent=0
    #allocation3 [shape = 'u8[512]{0}', space=vmem, size = 0x400, scoped, tag = 'output window, operand 0, single buffered']
    #allocation4 [shape = 's32[1]{0}', space=sflag, size = 0x4, scoped, tag = 'scoped memory for tpu_custom_call.1']
    %13 = vsyncpa [#allocation4], 0
    // Predicated region
    $region2: #{tpu_custom_call.1} parent=1 // pred_check
      _
    $region3: #{tpu_custom_call.1} parent=1 // pred_check_branch
      %15 = sbr.rel (0) target = $region5
    $region4: #{tpu_custom_call.1} parent=1 // pred_region
      _
    $region5: #{tpu_custom_call.1} parent=1 // pred_fallthru
      _
    // Predicated region
    $region6: #{tpu_custom_call.1} parent=1 // pred_check
      _
    $region7: #{tpu_custom_call.1} parent=1 // pred_check_branch
      %17 = sbr.rel (0) target = $region9
    $region8: #{tpu_custom_call.1} parent=1 // pred_region
      _
    $region9: #{tpu_custom_call.1} parent=1 // pred_fallthru
      _
    // Predicated region
    $region10: #{tpu_custom_call.1} parent=1 // pred_check
      _
    $region11: #{tpu_custom_call.1} parent=1 // pred_check_branch
      %19 = sbr.rel (0) target = $region13
    $region12: #{tpu_custom_call.1} parent=1 // pred_region
      _
    $region13: #{tpu_custom_call.1} parent=1 // pred_fallthru
      _
    // Predicated region
    $region14: #{tpu_custom_call.1} parent=1 // pred_check
      _
    $region15: #{tpu_custom_call.1} parent=1 // pred_check_branch
      %21 = sbr.rel (0) target = $region17
    $region16: #{tpu_custom_call.1} parent=1 // pred_region
      _
    $region17: #{tpu_custom_call.1} parent=1 // pred_fallthru
      _
    // Predicated region
    $region18: #{tpu_custom_call.1} parent=1 // pred_check
      _
    $region19: #{tpu_custom_call.1} parent=1 // pred_check_branch
      %23 = sbr.rel (0) target = $region21
    $region20: #{tpu_custom_call.1} parent=1 // pred_region
      _
    $region21: #{tpu_custom_call.1} parent=1 // pred_fallthru
      _
    // Predicated region
    $region22: #{tpu_custom_call.1} parent=1 // pred_check
      _
    $region23: #{tpu_custom_call.1} parent=1 // pred_check_branch
      %25 = sbr.rel (0) target = $region25
    $region24: #{tpu_custom_call.1} parent=1 // pred_region
      _
    $region25: #{tpu_custom_call.1} parent=1 // pred_fallthru
      _
    // Predicated region
    $region26: #{tpu_custom_call.1} parent=1 // pred_check
      _
    $region27: #{tpu_custom_call.1} parent=1 // pred_check_branch
      %27 = sbr.rel (0) target = $region29
    $region28: #{tpu_custom_call.1} parent=1 // pred_region
      _
    $region29: #{tpu_custom_call.1} parent=1 // pred_fallthru
      _
    %v29 = vld [vmem:[%s0] sm:$0xff]
    %v30 = vpack.c.bf16 %v29, %v29
    %v31 = vld [vmem:[%s1] sm:$0xf]
    %v32 = vld [vmem:[%s1 + $0x4] sm:$0xf]
    %v33 = vld [vmem:[%s1 + $0x8] sm:$0xf]
    %v34 = vld [vmem:[%s1 + $0xc] sm:$0xf]
    %v35 = vld [vmem:[%s1 + $0x10] sm:$0xf]
    %v36 = vld [vmem:[%s1 + $0x14] sm:$0xf]
    %v37 = vld [vmem:[%s1 + $0x18] sm:$0xf]
    %v38 = vld [vmem:[%s1 + $0x1c] sm:$0x3]
    %v39 = vld [vmem:[%s2] sm:$0xff]
    %v40 = vld [vmem:[%s2 + $0x8] sm:$0xff]
    %v41 = vld [vmem:[%s2 + $0x10] sm:$0xff]
    %v42 = vld [vmem:[%s2 + $0x18] sm:$0xff]
    %v43 = vld [vmem:[%s2 + $0x20] sm:$0xff]
    %v44 = vld [vmem:[%s2 + $0x28] sm:$0xff]
    %v45 = vld [vmem:[%s2 + $0x30] sm:$0xff]
    %v46 = vld [vmem:[%s2 + $0x38] sm:$0xf]
    %48 = vset.pattern.permute.xlu0 0
    %49 = vperm.xlu0 %48, %v39
    %v50 = vpop.permute.xlu0 %49
    %53 = vset.pattern.permute.xlu0 0
    %54 = vperm.xlu0 %53, %v40
    %v55 = vpop.permute.xlu0 %54
    %58 = vset.pattern.permute.xlu0 0
    %59 = vperm.xlu0 %58, %v41
    %v60 = vpop.permute.xlu0 %59
    %63 = vset.pattern.permute.xlu0 0
    %64 = vperm.xlu0 %63, %v42
    %v65 = vpop.permute.xlu0 %64
    %68 = vset.pattern.permute.xlu0 0
    %69 = vperm.xlu0 %68, %v43
    %v70 = vpop.permute.xlu0 %69
    %73 = vset.pattern.permute.xlu0 0
    %74 = vperm.xlu0 %73, %v44
    %v75 = vpop.permute.xlu0 %74
    %78 = vset.pattern.permute.xlu0 0
    %79 = vperm.xlu0 %78, %v45
    %v80 = vpop.permute.xlu0 %79
    %83 = vset.pattern.permute.xlu0 0
    %84 = vperm.xlu0 %83, %v46
    %v85 = vpop.permute.xlu0 %84
    %v95 = vunpack.c.l.b16 %v31
    %v96 = vunpack.c.l.b16 %v32
    %v97 = vunpack.c.l.b16 %v33
    %v98 = vunpack.c.l.b16 %v34
    %v99 = vunpack.c.l.b16 %v35
    %v100 = vunpack.c.l.b16 %v36
    %v101 = vunpack.c.l.b16 %v37
    %v102 = vunpack.c.l.b16 %v38
    %v103 = vpack.c.b16 %v96, %v95
    %v104 = vpack.c.b16 %v98, %v97
    %v105 = vpack.c.b16 %v100, %v99
    %v106 = vpack.c.b16 %v102, %v101
    %vm107 = vcmask 64512
    %v109 = vsel %vm107, %v103, 0
    %v112 = vsel %vm107, %v104, 0
    %v115 = vsel %vm107, %v105, 0
    %v118 = vsel %vm107, %v106, 0
    %vm120 = vcmask 1043456
    %v122 = vsel %vm120, %v30, 0
    %124 = vmatprep.subr.bf16.mxu0 0
    %125 = vmatpush1.bf16.msra.mxu0 %v122
    %126 = vmatprep.subr.bf16.mxu0 0
    %127 = vmatpush1.bf16.msra.mxu0 0
    %128 = vmatprep.subr.bf16.mxu0 0
    %129 = vmatpush1.bf16.msra.mxu0 0
    %130 = vmatprep.subr.bf16.mxu0 0
    %131 = vmatpush1.bf16.msra.mxu0 0
    %132 = vmatprep.subr.bf16.mxu0 0
    %133 = vmatpush1.bf16.msra.mxu0 0
    %134 = vmatprep.subr.bf16.mxu0 0
    %135 = vmatpush1.bf16.msra.mxu0 0
    %136 = vmatprep.subr.bf16.mxu0 0
    %137 = vmatpush1.bf16.msra.mxu0 0
    %138 = vmatprep.subr.bf16.mxu0 0
    %139 = vmatpush1.bf16.msra.mxu0 0
    %140 = vmatprep.subr.bf16.mxu0 0
    %141 = vmatpush1.bf16.msra.mxu0 0
    %142 = vmatprep.subr.bf16.mxu0 0
    %143 = vmatpush1.bf16.msra.mxu0 0
    %144 = vmatprep.subr.bf16.mxu0 0
    %145 = vmatpush1.bf16.msra.mxu0 0
    %146 = vmatprep.subr.bf16.mxu0 0
    %147 = vmatpush1.bf16.msra.mxu0 0
    %148 = vmatprep.subr.bf16.mxu0 0
    %149 = vmatpush1.bf16.msra.mxu0 0
    %150 = vmatprep.subr.bf16.mxu0 0
    %151 = vmatpush1.bf16.msra.mxu0 0
    %152 = vmatprep.subr.bf16.mxu0 0
    %153 = vmatpush1.bf16.msra.mxu0 0
    %154 = vmatprep.subr.bf16.mxu0 0
    %155 = vmatpush1.bf16.msra.mxu0 0
    %156 = vmatprep.mubr.bf16.mxu0 0
    %157 = vmatmul.mubr.bf16.gmra.mrb[0].mxu0 %v109
    %v158 = vpop.f32.mrb[0].mxu0
    %v159 = vadd.f32 %v50, %v158
    %v160 = vpop.f32.mrb[0].mxu0
    %v161 = vpop.f32.mrb[0].mxu0
    %v162 = vadd.f32 %v55, %v161
    %v163 = vpop.f32.mrb[0].mxu0
    %164 = vmatprep.mubr.bf16.mxu0 0
    %165 = vmatmul.mubr.bf16.gmra.mrb[0].mxu0 %v112
    %v166 = vpop.f32.mrb[0].mxu0
    %v167 = vadd.f32 %v60, %v166
    %v168 = vpop.f32.mrb[0].mxu0
    %v169 = vpop.f32.mrb[0].mxu0
    %v170 = vadd.f32 %v65, %v169
    %v171 = vpop.f32.mrb[0].mxu0
    %172 = vmatprep.mubr.bf16.mxu0 0
    %173 = vmatmul.mubr.bf16.gmra.mrb[0].mxu0 %v115
    %v174 = vpop.f32.mrb[0].mxu0
    %v175 = vadd.f32 %v70, %v174
    %v176 = vpop.f32.mrb[0].mxu0
    %v177 = vpop.f32.mrb[0].mxu0
    %v178 = vadd.f32 %v75, %v177
    %v179 = vpop.f32.mrb[0].mxu0
    %180 = vmatprep.mubr.bf16.mxu0 0
    %181 = vmatmul.mubr.bf16.gmra.mrb[0].mxu0 %v118
    %v182 = vpop.f32.mrb[0].mxu0
    %v183 = vadd.f32 %v80, %v182
    %v184 = vpop.f32.mrb[0].mxu0
    %v185 = vpop.f32.mrb[0].mxu0
    %v186 = vadd.f32 %v85, %v185
    %v187 = vpop.f32.mrb[0].mxu0
    %188 = vdwg.mxu0
    %v189 = vmul.f32 %v159, 0.5
    %v190 = vmul.f32 %v162, 0.5
    %v191 = vmul.f32 %v167, 0.5
    %v192 = vmul.f32 %v170, 0.5
    %v193 = vmul.f32 %v175, 0.5
    %v194 = vmul.f32 %v178, 0.5
    %v195 = vmul.f32 %v183, 0.5
    %v196 = vmul.f32 %v186, 0.5
    %v197 = vtanh.pop %v189
    %v198 = vtanh.pop %v190
    %v199 = vtanh.pop %v191
    %v200 = vtanh.pop %v192
    %v201 = vtanh.pop %v193
    %v202 = vtanh.pop %v194
    %v203 = vtanh.pop %v195
    %v204 = vtanh.pop %v196
    %v205 = vmul.f32 %v197, 0.5
    %v206 = vmul.f32 %v198, 0.5
    %v207 = vmul.f32 %v199, 0.5
    %v208 = vmul.f32 %v200, 0.5
    %v209 = vmul.f32 %v201, 0.5
    %v210 = vmul.f32 %v202, 0.5
    %v211 = vmul.f32 %v203, 0.5
    %v212 = vmul.f32 %v204, 0.5
    %v213 = vadd.f32 %v205, 0.5
    %v214 = vadd.f32 %v206, 0.5
    %v215 = vadd.f32 %v207, 0.5
    %v216 = vadd.f32 %v208, 0.5
    %v217 = vadd.f32 %v209, 0.5
    %v218 = vadd.f32 %v210, 0.5
    %v219 = vadd.f32 %v211, 0.5
    %v220 = vadd.f32 %v212, 0.5
    %v221 = vld [vmem:[%s3] sm:$0xf]
    %v222 = vld [vmem:[%s3 + $0x4] sm:$0x1]
    %v223 = vpack.c.bf16 %v214, %v213
    %v224 = vpack.c.bf16 %v216, %v215
    %v225 = vpack.c.bf16 %v218, %v217
    %v226 = vpack.c.bf16 %v220, %v219
    %v227 = vld [vmem:[%s4] sm:$0xff]
    %v228 = vld [vmem:[%s4 + $0x8] sm:$0x3]
    %230 = vset.pattern.permute.xlu0 0
    %231 = vperm.xlu0 %230, %v227
    %v232 = vpop.permute.xlu0 %231
    %235 = vset.pattern.permute.xlu0 0
    %236 = vperm.xlu0 %235, %v228
    %v237 = vpop.permute.xlu0 %236
    %v241 = vunpack.c.l.b16 %v221
    %v242 = vunpack.c.l.b16 %v222
    %v243 = vpack.c.b16 %v242, %v241
    %vm244 = vcmask 490496
    %v246 = vsel %vm244, %v243, 0
    %vm248 = vcmask 1045504
    %v250 = vsel %vm248, %v226, 0
    %252 = vmatprep.subr.bf16.mxu0 0
    %253 = vmatpush1.bf16.msra.mxu0 %v223
    %254 = vmatprep.subr.bf16.mxu0 0
    %255 = vmatpush1.bf16.msra.mxu0 %v224
    %256 = vmatprep.subr.bf16.mxu0 0
    %257 = vmatpush1.bf16.msra.mxu0 %v225
    %258 = vmatprep.subr.bf16.mxu0 0
    %259 = vmatpush1.bf16.msra.mxu0 %v250
    %260 = vmatprep.subr.bf16.mxu0 0
    %261 = vmatpush1.bf16.msra.mxu0 0
    %262 = vmatprep.subr.bf16.mxu0 0
    %263 = vmatpush1.bf16.msra.mxu0 0
    %264 = vmatprep.subr.bf16.mxu0 0
    %265 = vmatpush1.bf16.msra.mxu0 0
    %266 = vmatprep.subr.bf16.mxu0 0
    %267 = vmatpush1.bf16.msra.mxu0 0
    %268 = vmatprep.subr.bf16.mxu0 0
    %269 = vmatpush1.bf16.msra.mxu0 0
    %270 = vmatprep.subr.bf16.mxu0 0
    %271 = vmatpush1.bf16.msra.mxu0 0
    %272 = vmatprep.subr.bf16.mxu0 0
    %273 = vmatpush1.bf16.msra.mxu0 0
    %274 = vmatprep.subr.bf16.mxu0 0
    %275 = vmatpush1.bf16.msra.mxu0 0
    %276 = vmatprep.subr.bf16.mxu0 0
    %277 = vmatpush1.bf16.msra.mxu0 0
    %278 = vmatprep.subr.bf16.mxu0 0
    %279 = vmatpush1.bf16.msra.mxu0 0
    %280 = vmatprep.subr.bf16.mxu0 0
    %281 = vmatpush1.bf16.msra.mxu0 0
    %282 = vmatprep.subr.bf16.mxu0 0
    %283 = vmatpush1.bf16.msra.mxu0 0
    %284 = vmatprep.mubr.bf16.mxu0 0
    %285 = vmatmul.mubr.bf16.gmra.mrb[0].mxu0 %v246
    %v286 = vpop.f32.mrb[0].mxu0
    %v287 = vadd.f32 %v232, %v286
    %v288 = vpop.f32.mrb[0].mxu0
    %v289 = vpop.f32.mrb[0].mxu0
    %v290 = vadd.f32 %v237, %v289
    %v291 = vpop.f32.mrb[0].mxu0
    %292 = vdwg.mxu0
    %v293 = vmul.f32 %v287, 0.5
    %v294 = vmul.f32 %v290, 0.5
    %v295 = vtanh.pop %v293
    %v296 = vtanh.pop %v294
    %v297 = vmul.f32 %v295, 0.5
    %v298 = vmul.f32 %v296, 0.5
    %v299 = vadd.f32 %v297, 0.5
    %v300 = vadd.f32 %v298, 0.5
    %v301 = vld [vmem:[%s5] sm:$0xff]
    %v302 = vld [vmem:[%s5 + $0x8] sm:$0x3]
    %304 = vset.pattern.permute.xlu0 0
    %305 = vperm.xlu0 %304, %v301
    %v306 = vpop.permute.xlu0 %305
    %309 = vset.pattern.permute.xlu0 0
    %310 = vperm.xlu0 %309, %v302
    %v311 = vpop.permute.xlu0 %310
    %v313 = vmul.f32 %v306, %v299
    %v314 = vmul.f32 %v311, %v300
    %vm315 = vcmask 1041408
    %v316 = vsel %vm315, %v314, 0.0
    %v317 = vadd.f32 %v313, %v316
    %v318 = vrot.slane %v317, 4
    %v319 = vadd.f32 %v317, %v318
    %v320 = vrot.slane %v319, 2
    %v321 = vadd.f32 %v319, %v320
    %v322 = vrot.slane %v321, 1
    %v323 = vadd.f32 %v321, %v322
    %s324 = sld [smem:[#allocation2]]
    %v325 = vstv %s324
    %v326 = vadd.f32 %v323, %v325
    %v327 = vmul.f32 %v326, 0.5
    %v328 = vtanh.pop %v327
    %v329 = vmul.f32 %v328, 0.5
    %v330 = vadd.f32 %v329, 0.5
    %331 = vst [vmem:[#allocation3] sm:$0x1] %v330
    // Predicated region
    $region30: #{tpu_custom_call.1} parent=1 // pred_check
      _
    $region31: #{tpu_custom_call.1} parent=1 // pred_check_branch
      %333 = sbr.rel (0) target = $region33
    $region32: #{tpu_custom_call.1} parent=1 // pred_region
      %s335 = ssub.s32 16, 16
      %336 = vsyncadd [#allocation4], %s335
      %s338 = sshll.u32 [#allocation3], 4
      %s339 = int_to_ptr.vmem [resolvable:$true] %s338
      %341 = dma.vmem_to_hbm [thread:$0]  %s339, 16, %s7, [#allocation4]
    $region33: #{tpu_custom_call.1} parent=1 // pred_fallthru
      _
    // Predicated region
    $region34: #{tpu_custom_call.1} parent=1 // pred_check
      _
    $region35: #{tpu_custom_call.1} parent=1 // pred_check_branch
      %343 = sbr.rel (0) target = $region37
    $region36: #{tpu_custom_call.1} parent=1 // pred_region
      %344 = dma.done [#allocation4], 16
    $region37: #{tpu_custom_call.1} parent=1 // pred_fallthru
      _
    %345 = vsyncpa [#allocation4], 1

</llo_original>
